<compile_context>
chip_gen: v7x
topology: tpu7x:2x2x1
jax: 0.10.0
libtpu: 0.0.40
codegen_flags: <defaults>
</compile_context>

<pallas_src>
import functools

import jax
import jax.numpy as jnp
from jax.experimental import pallas as pl
from jax.experimental.pallas import tpu as pltpu


def sgu_kernel(x_ref, w_ref, b_ref, gamma_ref, beta_ref, ta_ref, o_ref, *,
               matmul_dtype):
    # x_ref:  (TB, S, D)   TB batch elements (u | v halves along D)
    # w_ref:  (S, S)       proj weight, already in matmul_dtype
    # b_ref:  (S, 1)       proj bias
    # gamma_ref, beta_ref: (1, G)  LayerNorm affine params
    # ta_ref: (TB, S, G)   additive term
    # o_ref:  (TB, S, G)
    eps = 1e-5
    TB, S, D = x_ref.shape
    G = D // 2

    # Load only the gate half; LN statistics in f32.
    v = x_ref[:, :, G:].astype(jnp.float32)            # (TB, S, G)

    # Fused LayerNorm: one reduction pass (mean, mean(v*v)), one fused
    # elementwise pass v * scale + shift.
    mean = jnp.mean(v, axis=-1, keepdims=True)          # (TB, S, 1)
    mean_sq = jnp.mean(v * v, axis=-1, keepdims=True)   # (TB, S, 1)
    var = mean_sq - mean * mean
    inv = jax.lax.rsqrt(var + eps)                      # EUP
    gamma = gamma_ref[0].astype(jnp.float32)            # (G,)
    beta = beta_ref[0].astype(jnp.float32)              # (G,)
    scale = gamma * inv                                 # (TB, S, G)
    shift = beta - mean * scale                         # (TB, S, G)
    v_norm = (v * scale + shift).astype(matmul_dtype)   # (TB, S, G)

    w = w_ref[...]                                      # matmul_dtype, resident
    bias = b_ref[...].astype(jnp.float32)               # (S, 1)

    for bb in range(TB):
        # (S, S) x (S, G) on the MXU, f32 accumulation.
        v_proj = jnp.dot(w, v_norm[bb], preferred_element_type=jnp.float32)
        gate = v_proj + bias + ta_ref[bb].astype(jnp.float32)        # (S, G)
        u_bb = x_ref[bb, :, :G].astype(jnp.float32)                  # lazy u load
        o_ref[bb] = (u_bb * gate).astype(o_ref.dtype)


def _tpu_vmem_capacity_bytes():
    """Physical per-core VMEM capacity; conservative default if unknown."""
    try:
        info = pltpu.get_tpu_info()
        for attr in ("vmem_capacity_bytes", "vmem_bytes", "vmem_size_bytes"):
            cap = getattr(info, attr, None)
            if cap:
                return int(cap)
    except Exception:
        pass
    return 128 * 1024 * 1024


def _pick_block_b(B, S, D, x_itemsize, w_itemsize, vmem_limit_bytes,
                  min_grid_steps):
    """Largest divisor of B whose block fits the VMEM budget.

    Models: double-buffered x / ta / out blocks, the single-buffered
    matmul-dtype W (plus small bias/gamma/beta), and ~4x f32 temporaries of
    size TB*S*G for the LayerNorm / gate epilogue.  Also keeps the grid at
    least `min_grid_steps` long (v7x: 2 TensorCores per chip).
    """
    G = D // 2
    budget = int(vmem_limit_bytes * 0.9)                 # headroom for scratch
    w_bytes = S * S * w_itemsize                         # single-buffered
    small = 2 * (S + 2 * G) * 4                          # bias + gamma + beta
    max_tb = max(1, B // min_grid_steps)
    best = 1
    for tb in range(1, max_tb + 1):
        if B % tb:
            continue
        io_bytes = 2 * tb * S * (D + 2 * G) * x_itemsize  # x, ta, out (2x buf)
        tmp_bytes = 4 * tb * S * G * 4                    # f32 temporaries
        if w_bytes + small + io_bytes + tmp_bytes > budget:
            break
        best = tb
    return best


def spatial_gating_unit(x, w, b, gamma, beta, ta, *, block_b=None,
                        matmul_dtype=jnp.bfloat16):
    """SpatialGatingUnit forward.

    Note: matmul_dtype defaults to bfloat16 (MXU operands, f32 accumulation)
    for throughput; pass matmul_dtype=jnp.float32 for strict numerical parity
    with the f32 PyTorch module.
    """
    B, S, D = x.shape
    assert D % 2 == 0, "dim must be even for the u/v split"
    G = D // 2
    assert w.shape == (S, S) and b.shape == (S,)
    assert gamma.shape == (G,) and beta.shape == (G,)
    assert ta.shape == (B, S, G)

    x_itemsize = jnp.dtype(x.dtype).itemsize
    w_mm = w.astype(matmul_dtype)            # cast once, outside the kernel
    w_itemsize = jnp.dtype(matmul_dtype).itemsize

    cap = _tpu_vmem_capacity_bytes()
    vmem_limit = (cap * 3) // 4              # ~48 MiB on v7x, ~96 MiB on v5e/v6e
    # v7x-like chips (<= ~64 MiB VMEM) have 2 TensorCores: keep >= 2 grid steps.
    min_grid_steps = 2 if cap <= 80 * 1024 * 1024 else 1

    if block_b is None:
        block_b = _pick_block_b(B, S, D, x_itemsize, w_itemsize,
                                vmem_limit, min_grid_steps)
    assert B % block_b == 0, "block_b must divide the batch size"

    b2 = b.reshape(S, 1)
    gamma2 = gamma.reshape(1, G)
    beta2 = beta.reshape(1, G)

    kernel = functools.partial(sgu_kernel, matmul_dtype=matmul_dtype)

    cost = pl.CostEstimate(
        flops=2 * B * S * S * G + 10 * B * S * G,
        transcendentals=B * S,
        bytes_accessed=(B * S * D + 2 * B * S * G) * x_itemsize
        + S * S * w_itemsize,
    )

    def build(single_buffer_consts):
        const_kw = ({"pipeline_mode": pl.Buffered(1)}
                    if single_buffer_consts else {})
        grid_spec = pltpu.PrefetchScalarGridSpec(
            num_scalar_prefetch=0,
            grid=(B // block_b,),
            in_specs=[
                pl.BlockSpec((block_b, S, D), lambda i: (i, 0, 0)),      # x
                pl.BlockSpec((S, S), lambda i: (0, 0), **const_kw),      # W
                pl.BlockSpec((S, 1), lambda i: (0, 0), **const_kw),      # bias
                pl.BlockSpec((1, G), lambda i: (0, 0), **const_kw),      # gamma
                pl.BlockSpec((1, G), lambda i: (0, 0), **const_kw),      # beta
                pl.BlockSpec((block_b, S, G), lambda i: (i, 0, 0)),      # ta
            ],
            out_specs=pl.BlockSpec((block_b, S, G), lambda i: (i, 0, 0)),
        )
        return pl.pallas_call(
            kernel,
            out_shape=jax.ShapeDtypeStruct((B, S, G), x.dtype),
            grid_spec=grid_spec,
            compiler_params=pltpu.CompilerParams(
                dimension_semantics=("parallel",),
                vmem_limit_bytes=vmem_limit,
            ),
            cost_estimate=cost,
        )

    try:
        # Grid-invariant operands single-buffered (reclaims VMEM for blocks).
        return build(True)(x, w_mm, b2, gamma2, beta2, ta)
    except Exception:
        # pipeline_mode=Buffered(1) not supported on this jax version:
        # fall back to default double buffering (correctness unchanged).
        return build(False)(x, w_mm, b2, gamma2, beta2, ta)


def spatial_gating_unit_ref(x, w, b, gamma, beta, ta, *, matmul_dtype=None):
    # Pure-JAX reference mirroring the PyTorch forward (two-pass LayerNorm).
    D = x.shape[-1]
    G = D // 2
    u, v = x[..., :G], x[..., G:]
    v = v.astype(jnp.float32)
    mean = jnp.mean(v, axis=-1, keepdims=True)
    var = jnp.mean((v - mean) ** 2, axis=-1, keepdims=True)
    v = (v - mean) * jax.lax.rsqrt(var + 1e-5) * gamma + beta
    if matmul_dtype is not None:
        w_mm = w.astype(matmul_dtype)
        v_mm = v.astype(matmul_dtype)
    else:
        w_mm, v_mm = w, v
    # Linear(seq_len, seq_len) applied along the sequence axis: W @ v + b[:,None]
    v = jnp.einsum('st,btg->bsg', w_mm, v_mm,
                   preferred_element_type=jnp.float32) + b[:, None]
    v = v + ta
    return (u.astype(jnp.float32) * v).astype(x.dtype)


if __name__ == "__main__":
    B, S, D = 2, 8, 32
    G = D // 2

    key = jax.random.PRNGKey(0)
    kx, kta, kw, kb = jax.random.split(key, 4)

    x = jax.random.normal(kx, (B, S, D), dtype=jnp.float32)
    ta = jax.random.normal(kta, (B, S, G), dtype=jnp.float32)

    # Deterministic parameter init mimicking PyTorch defaults:
    # nn.Linear(seq_len, seq_len): weight/bias ~ U(-1/sqrt(S), 1/sqrt(S))
    bound = 1.0 / (S ** 0.5)
    w = jax.random.uniform(kw, (S, S), jnp.float32, -bound, bound)
    b = jax.random.uniform(kb, (S,), jnp.float32, -bound, bound)
    # nn.LayerNorm(gate_dim): weight=1, bias=0
    gamma = jnp.ones((G,), jnp.float32)
    beta = jnp.zeros((G,), jnp.float32)

    # 1) f32 MXU path -- tight check against the pure-JAX reference
    #    (tolerance covers the fused-LN reassociation, ~1e-6).
    out_f32 = spatial_gating_unit(x, w, b, gamma, beta, ta,
                                  matmul_dtype=jnp.float32)
    out_f32 = jax.block_until_ready(out_f32)
    ref_f32 = spatial_gating_unit_ref(x, w, b, gamma, beta, ta)
    assert out_f32.shape == (B, S, G)
    assert jnp.allclose(out_f32, ref_f32, atol=1e-4, rtol=1e-4)

    # 2) Default bf16-operand MXU path -- checked against a reference using the
    #    same bf16 operand quantization (f32 accumulation in both).  Looser
    #    tolerance: the fused LN can flip an occasional bf16 rounding (1 ulp).
    out_bf16 = spatial_gating_unit(x, w, b, gamma, beta, ta)
    out_bf16 = jax.block_until_ready(out_bf16)
    ref_bf16 = spatial_gating_unit_ref(x, w, b, gamma, beta, ta,
                                       matmul_dtype=jnp.bfloat16)
    assert out_bf16.shape == (B, S, G)
    assert jnp.allclose(out_bf16, ref_bf16, atol=2e-2, rtol=2e-2)

    print("KERNEL_OK")
</pallas_src>

<mosaic_0001>
module attributes {stable_mosaic.version = 11 : i64} {
  func.func @sgu_kernel(%arg0: i32, %arg1: memref<2x8x32xf32, #tpu.memory_space<vmem>>, %arg2: memref<8x8xf32, #tpu.memory_space<vmem>>, %arg3: memref<8x1xf32, #tpu.memory_space<vmem>>, %arg4: memref<1x16xf32, #tpu.memory_space<vmem>>, %arg5: memref<1x16xf32, #tpu.memory_space<vmem>>, %arg6: memref<2x8x16xf32, #tpu.memory_space<vmem>>, %arg7: memref<2x8x16xf32, #tpu.memory_space<vmem>>) attributes {dimension_semantics = [#tpu.dimension_semantics<parallel>], iteration_bounds = array<i64: 1>, scalar_prefetch = 0 : i64, scratch_operands = 0 : i64, tpu.core_type = #tpu.core_type<tc>, window_params = [{transform_indices = @transform_0, window_bounds = array<i64: 2, 8, 32>}, {pipeline_mode = #tpu.pipeline_mode<synchronous>, transform_indices = @transform_1, window_bounds = array<i64: 8, 8>}, {pipeline_mode = #tpu.pipeline_mode<synchronous>, transform_indices = @transform_2, window_bounds = array<i64: 8, 1>}, {pipeline_mode = #tpu.pipeline_mode<synchronous>, transform_indices = @transform_3, window_bounds = array<i64: 1, 16>}, {pipeline_mode = #tpu.pipeline_mode<synchronous>, transform_indices = @transform_4, window_bounds = array<i64: 1, 16>}, {transform_indices = @transform_5, window_bounds = array<i64: 2, 8, 16>}, {transform_indices = @transform_6, window_bounds = array<i64: 2, 8, 16>}]} {
    %c0 = arith.constant 0 : index
    %c0_0 = arith.constant 0 : index
    %c16 = arith.constant 16 : index
    %0 = vector.load %arg1[%c0, %c0_0, %c16] : memref<2x8x32xf32, #tpu.memory_space<vmem>>, vector<2x8x16xf32>
    %cst = arith.constant dense<0.000000e+00> : vector<2x8xf32>
    %1 = vector.multi_reduction <add>, %0, %cst [2] : vector<2x8x16xf32> to vector<2x8xf32>
    %2 = vector.shape_cast %1 : vector<2x8xf32> to vector<2x8x1xf32>
    %cst_1 = arith.constant 1.600000e+01 : f32
    %3 = vector.broadcast %cst_1 : f32 to vector<2x8x1xf32>
    %4 = arith.divf %2, %3 : vector<2x8x1xf32>
    %5 = arith.mulf %0, %0 : vector<2x8x16xf32>
    %cst_2 = arith.constant dense<0.000000e+00> : vector<2x8xf32>
    %6 = vector.multi_reduction <add>, %5, %cst_2 [2] : vector<2x8x16xf32> to vector<2x8xf32>
    %7 = vector.shape_cast %6 : vector<2x8xf32> to vector<2x8x1xf32>
    %cst_3 = arith.constant 1.600000e+01 : f32
    %8 = vector.broadcast %cst_3 : f32 to vector<2x8x1xf32>
    %9 = arith.divf %7, %8 : vector<2x8x1xf32>
    %10 = arith.mulf %4, %4 : vector<2x8x1xf32>
    %11 = arith.subf %9, %10 : vector<2x8x1xf32>
    %cst_4 = arith.constant 9.99999974E-6 : f32
    %12 = vector.broadcast %cst_4 : f32 to vector<2x8x1xf32>
    %13 = arith.addf %11, %12 : vector<2x8x1xf32>
    %14 = math.rsqrt %13 : vector<2x8x1xf32>
    %c0_5 = arith.constant 0 : index
    %c0_6 = arith.constant 0 : index
    %15 = vector.load %arg4[%c0_5, %c0_6] : memref<1x16xf32, #tpu.memory_space<vmem>>, vector<1x16xf32>
    %16 = vector.shape_cast %15 : vector<1x16xf32> to vector<16xf32>
    %c0_7 = arith.constant 0 : index
    %c0_8 = arith.constant 0 : index
    %17 = vector.load %arg5[%c0_7, %c0_8] : memref<1x16xf32, #tpu.memory_space<vmem>>, vector<1x16xf32>
    %18 = vector.shape_cast %17 : vector<1x16xf32> to vector<16xf32>
    %19 = vector.shape_cast %16 : vector<16xf32> to vector<1x1x16xf32>
    %20 = vector.broadcast %19 : vector<1x1x16xf32> to vector<2x8x16xf32>
    %21 = vector.broadcast %14 : vector<2x8x1xf32> to vector<2x8x16xf32>
    %22 = arith.mulf %20, %21 : vector<2x8x16xf32>
    %23 = vector.broadcast %4 : vector<2x8x1xf32> to vector<2x8x16xf32>
    %24 = arith.mulf %23, %22 : vector<2x8x16xf32>
    %25 = vector.shape_cast %18 : vector<16xf32> to vector<1x1x16xf32>
    %26 = vector.broadcast %25 : vector<1x1x16xf32> to vector<2x8x16xf32>
    %27 = arith.subf %26, %24 : vector<2x8x16xf32>
    %28 = arith.mulf %0, %22 : vector<2x8x16xf32>
    %29 = arith.addf %28, %27 : vector<2x8x16xf32>
    %c0_9 = arith.constant 0 : index
    %c0_10 = arith.constant 0 : index
    %30 = vector.load %arg2[%c0_9, %c0_10] : memref<8x8xf32, #tpu.memory_space<vmem>>, vector<8x8xf32>
    %c0_11 = arith.constant 0 : index
    %c0_12 = arith.constant 0 : index
    %31 = vector.load %arg3[%c0_11, %c0_12] : memref<8x1xf32, #tpu.memory_space<vmem>>, vector<8x1xf32>
    %32 = vector.extract_strided_slice %29 {offsets = [0, 0, 0], sizes = [1, 8, 16], strides = [1, 1, 1]} : vector<2x8x16xf32> to vector<1x8x16xf32>
    %33 = vector.shape_cast %32 : vector<1x8x16xf32> to vector<8x16xf32>
    %cst_13 = arith.constant dense<0.000000e+00> : vector<8x16xf32>
    %34 = tpu.matmul %30, %33, %cst_13 {dimension_numbers = #tpu.dot_dimension_numbers<[1], [0], [0], [1], [0, 0, 1, 1], [], []>} : vector<8x8xf32>, vector<8x16xf32>, vector<8x16xf32> -> vector<8x16xf32>
    %35 = vector.broadcast %31 : vector<8x1xf32> to vector<8x16xf32>
    %36 = arith.addf %34, %35 : vector<8x16xf32>
    %c0_14 = arith.constant 0 : index
    %c0_15 = arith.constant 0 : index
    %c0_16 = arith.constant 0 : index
    %37 = vector.load %arg6[%c0_14, %c0_15, %c0_16] : memref<2x8x16xf32, #tpu.memory_space<vmem>>, vector<1x8x16xf32>
    %38 = vector.shape_cast %37 : vector<1x8x16xf32> to vector<8x16xf32>
    %39 = arith.addf %36, %38 : vector<8x16xf32>
    %c0_17 = arith.constant 0 : index
    %c0_18 = arith.constant 0 : index
    %c0_19 = arith.constant 0 : index
    %40 = vector.load %arg1[%c0_17, %c0_18, %c0_19] : memref<2x8x32xf32, #tpu.memory_space<vmem>>, vector<1x8x16xf32>
    %41 = vector.shape_cast %40 : vector<1x8x16xf32> to vector<8x16xf32>
    %42 = arith.mulf %41, %39 : vector<8x16xf32>
    %c0_20 = arith.constant 0 : index
    %c0_21 = arith.constant 0 : index
    %c0_22 = arith.constant 0 : index
    %43 = vector.load %arg7[%c0_20, %c0_21, %c0_22] : memref<2x8x16xf32, #tpu.memory_space<vmem>>, vector<1x8x16xf32>
    %44 = vector.shape_cast %43 : vector<1x8x16xf32> to vector<8x16xf32>
    %45 = vector.shape_cast %42 : vector<8x16xf32> to vector<1x8x16xf32>
    tpu.vector_store %arg7[%c0_20, %c0_21, %c0_22], %45 {strides = array<i32>} : memref<2x8x16xf32, #tpu.memory_space<vmem>>, vector<1x8x16xf32>,
    %46 = vector.extract_strided_slice %29 {offsets = [1, 0, 0], sizes = [1, 8, 16], strides = [1, 1, 1]} : vector<2x8x16xf32> to vector<1x8x16xf32>
    %47 = vector.shape_cast %46 : vector<1x8x16xf32> to vector<8x16xf32>
    %cst_23 = arith.constant dense<0.000000e+00> : vector<8x16xf32>
    %48 = tpu.matmul %30, %47, %cst_23 {dimension_numbers = #tpu.dot_dimension_numbers<[1], [0], [0], [1], [0, 0, 1, 1], [], []>} : vector<8x8xf32>, vector<8x16xf32>, vector<8x16xf32> -> vector<8x16xf32>
    %49 = vector.broadcast %31 : vector<8x1xf32> to vector<8x16xf32>
    %50 = arith.addf %48, %49 : vector<8x16xf32>
    %c1 = arith.constant 1 : index
    %c0_24 = arith.constant 0 : index
    %c0_25 = arith.constant 0 : index
    %51 = vector.load %arg6[%c1, %c0_24, %c0_25] : memref<2x8x16xf32, #tpu.memory_space<vmem>>, vector<1x8x16xf32>
    %52 = vector.shape_cast %51 : vector<1x8x16xf32> to vector<8x16xf32>
    %53 = arith.addf %50, %52 : vector<8x16xf32>
    %c1_26 = arith.constant 1 : index
    %c0_27 = arith.constant 0 : index
    %c0_28 = arith.constant 0 : index
    %54 = vector.load %arg1[%c1_26, %c0_27, %c0_28] : memref<2x8x32xf32, #tpu.memory_space<vmem>>, vector<1x8x16xf32>
    %55 = vector.shape_cast %54 : vector<1x8x16xf32> to vector<8x16xf32>
    %56 = arith.mulf %55, %53 : vector<8x16xf32>
    %c1_29 = arith.constant 1 : index
    %c0_30 = arith.constant 0 : index
    %c0_31 = arith.constant 0 : index
    %57 = vector.load %arg7[%c1_29, %c0_30, %c0_31] : memref<2x8x16xf32, #tpu.memory_space<vmem>>, vector<1x8x16xf32>
    %58 = vector.shape_cast %57 : vector<1x8x16xf32> to vector<8x16xf32>
    %59 = vector.shape_cast %56 : vector<8x16xf32> to vector<1x8x16xf32>
    tpu.vector_store %arg7[%c1_29, %c0_30, %c0_31], %59 {strides = array<i32>} : memref<2x8x16xf32, #tpu.memory_space<vmem>>, vector<1x8x16xf32>,
    return
  }
  func.func @transform_0(%arg0: i32) -> (i32, i32, i32) {
    %c0_i32 = arith.constant 0 : i32
    %c0_i32_0 = arith.constant 0 : i32
    %c0_i32_1 = arith.constant 0 : i32
    return %arg0, %c0_i32, %c0_i32_0 : i32, i32, i32
  }
  func.func @transform_1(%arg0: i32) -> (i32, i32) {
    %c0_i32 = arith.constant 0 : i32
    %c0_i32_0 = arith.constant 0 : i32
    %c0_i32_1 = arith.constant 0 : i32
    return %c0_i32, %c0_i32_0 : i32, i32
  }
  func.func @transform_2(%arg0: i32) -> (i32, i32) {
    %c0_i32 = arith.constant 0 : i32
    %c0_i32_0 = arith.constant 0 : i32
    %c0_i32_1 = arith.constant 0 : i32
    return %c0_i32, %c0_i32_0 : i32, i32
  }
  func.func @transform_3(%arg0: i32) -> (i32, i32) {
    %c0_i32 = arith.constant 0 : i32
    %c0_i32_0 = arith.constant 0 : i32
    %c0_i32_1 = arith.constant 0 : i32
    return %c0_i32, %c0_i32_0 : i32, i32
  }
  func.func @transform_4(%arg0: i32) -> (i32, i32) {
    %c0_i32 = arith.constant 0 : i32
    %c0_i32_0 = arith.constant 0 : i32
    %c0_i32_1 = arith.constant 0 : i32
    return %c0_i32, %c0_i32_0 : i32, i32
  }
  func.func @transform_5(%arg0: i32) -> (i32, i32, i32) {
    %c0_i32 = arith.constant 0 : i32
    %c0_i32_0 = arith.constant 0 : i32
    %c0_i32_1 = arith.constant 0 : i32
    return %arg0, %c0_i32, %c0_i32_0 : i32, i32, i32
  }
  func.func @transform_6(%arg0: i32) -> (i32, i32, i32) {
    %c0_i32 = arith.constant 0 : i32
    %c0_i32_0 = arith.constant 0 : i32
    %c0_i32_1 = arith.constant 0 : i32
    return %arg0, %c0_i32, %c0_i32_0 : i32, i32, i32
  }
}

module attributes {stable_mosaic.version = 11 : i64} {
  func.func @sgu_kernel(%arg0: i32, %arg1: memref<2x8x32xf32, #tpu.memory_space<vmem>>, %arg2: memref<8x8xf32, #tpu.memory_space<vmem>>, %arg3: memref<8x1xf32, #tpu.memory_space<vmem>>, %arg4: memref<1x16xf32, #tpu.memory_space<vmem>>, %arg5: memref<1x16xf32, #tpu.memory_space<vmem>>, %arg6: memref<2x8x16xf32, #tpu.memory_space<vmem>>, %arg7: memref<2x8x16xf32, #tpu.memory_space<vmem>>) attributes {dimension_semantics = [#tpu.dimension_semantics<parallel>], iteration_bounds = array<i64: 1>, scalar_prefetch = 0 : i64, scratch_operands = 0 : i64, tpu.core_type = #tpu.core_type<tc>, window_params = [{transform_indices = @transform_0, window_bounds = array<i64: 2, 8, 32>}, {pipeline_mode = #tpu.pipeline_mode<synchronous>, transform_indices = @transform_1, window_bounds = array<i64: 8, 8>}, {pipeline_mode = #tpu.pipeline_mode<synchronous>, transform_indices = @transform_2, window_bounds = array<i64: 8, 1>}, {pipeline_mode = #tpu.pipeline_mode<synchronous>, transform_indices = @transform_3, window_bounds = array<i64: 1, 16>}, {pipeline_mode = #tpu.pipeline_mode<synchronous>, transform_indices = @transform_4, window_bounds = array<i64: 1, 16>}, {transform_indices = @transform_5, window_bounds = array<i64: 2, 8, 16>}, {transform_indices = @transform_6, window_bounds = array<i64: 2, 8, 16>}]} {
    %c0 = arith.constant 0 : index
    %c0_0 = arith.constant 0 : index
    %c16 = arith.constant 16 : index
    %0 = vector.load %arg1[%c0, %c0_0, %c16] : memref<2x8x32xf32, #tpu.memory_space<vmem>>, vector<2x8x16xf32>
    %cst = arith.constant dense<0.000000e+00> : vector<2x8xf32>
    %1 = vector.multi_reduction <add>, %0, %cst [2] : vector<2x8x16xf32> to vector<2x8xf32>
    %2 = vector.shape_cast %1 : vector<2x8xf32> to vector<2x8x1xf32>
    %cst_1 = arith.constant 1.600000e+01 : f32
    %3 = vector.broadcast %cst_1 : f32 to vector<2x8x1xf32>
    %4 = arith.divf %2, %3 : vector<2x8x1xf32>
    %5 = arith.mulf %0, %0 : vector<2x8x16xf32>
    %cst_2 = arith.constant dense<0.000000e+00> : vector<2x8xf32>
    %6 = vector.multi_reduction <add>, %5, %cst_2 [2] : vector<2x8x16xf32> to vector<2x8xf32>
    %7 = vector.shape_cast %6 : vector<2x8xf32> to vector<2x8x1xf32>
    %cst_3 = arith.constant 1.600000e+01 : f32
    %8 = vector.broadcast %cst_3 : f32 to vector<2x8x1xf32>
    %9 = arith.divf %7, %8 : vector<2x8x1xf32>
    %10 = arith.mulf %4, %4 : vector<2x8x1xf32>
    %11 = arith.subf %9, %10 : vector<2x8x1xf32>
    %cst_4 = arith.constant 9.99999974E-6 : f32
    %12 = vector.broadcast %cst_4 : f32 to vector<2x8x1xf32>
    %13 = arith.addf %11, %12 : vector<2x8x1xf32>
    %14 = math.rsqrt %13 : vector<2x8x1xf32>
    %c0_5 = arith.constant 0 : index
    %c0_6 = arith.constant 0 : index
    %15 = vector.load %arg4[%c0_5, %c0_6] : memref<1x16xf32, #tpu.memory_space<vmem>>, vector<1x16xf32>
    %16 = vector.shape_cast %15 : vector<1x16xf32> to vector<16xf32>
    %c0_7 = arith.constant 0 : index
    %c0_8 = arith.constant 0 : index
    %17 = vector.load %arg5[%c0_7, %c0_8] : memref<1x16xf32, #tpu.memory_space<vmem>>, vector<1x16xf32>
    %18 = vector.shape_cast %17 : vector<1x16xf32> to vector<16xf32>
    %19 = vector.shape_cast %16 : vector<16xf32> to vector<1x1x16xf32>
    %20 = vector.broadcast %19 : vector<1x1x16xf32> to vector<2x8x16xf32>
    %21 = vector.broadcast %14 : vector<2x8x1xf32> to vector<2x8x16xf32>
    %22 = arith.mulf %20, %21 : vector<2x8x16xf32>
    %23 = vector.broadcast %4 : vector<2x8x1xf32> to vector<2x8x16xf32>
    %24 = arith.mulf %23, %22 : vector<2x8x16xf32>
    %25 = vector.shape_cast %18 : vector<16xf32> to vector<1x1x16xf32>
    %26 = vector.broadcast %25 : vector<1x1x16xf32> to vector<2x8x16xf32>
    %27 = arith.subf %26, %24 : vector<2x8x16xf32>
    %28 = arith.mulf %0, %22 : vector<2x8x16xf32>
    %29 = arith.addf %28, %27 : vector<2x8x16xf32>
    %c0_9 = arith.constant 0 : index
    %c0_10 = arith.constant 0 : index
    %30 = vector.load %arg2[%c0_9, %c0_10] : memref<8x8xf32, #tpu.memory_space<vmem>>, vector<8x8xf32>
    %c0_11 = arith.constant 0 : index
    %c0_12 = arith.constant 0 : index
    %31 = vector.load %arg3[%c0_11, %c0_12] : memref<8x1xf32, #tpu.memory_space<vmem>>, vector<8x1xf32>
    %32 = vector.extract_strided_slice %29 {offsets = [0, 0, 0], sizes = [1, 8, 16], strides = [1, 1, 1]} : vector<2x8x16xf32> to vector<1x8x16xf32>
    %33 = vector.shape_cast %32 : vector<1x8x16xf32> to vector<8x16xf32>
    %cst_13 = arith.constant dense<0.000000e+00> : vector<8x16xf32>
    %34 = tpu.matmul %30, %33, %cst_13 {dimension_numbers = #tpu.dot_dimension_numbers<[1], [0], [0], [1], [0, 0, 1, 1], [], []>} : vector<8x8xf32>, vector<8x16xf32>, vector<8x16xf32> -> vector<8x16xf32>
    %35 = vector.broadcast %31 : vector<8x1xf32> to vector<8x16xf32>
    %36 = arith.addf %34, %35 : vector<8x16xf32>
    %c0_14 = arith.constant 0 : index
    %c0_15 = arith.constant 0 : index
    %c0_16 = arith.constant 0 : index
    %37 = vector.load %arg6[%c0_14, %c0_15, %c0_16] : memref<2x8x16xf32, #tpu.memory_space<vmem>>, vector<1x8x16xf32>
    %38 = vector.shape_cast %37 : vector<1x8x16xf32> to vector<8x16xf32>
    %39 = arith.addf %36, %38 : vector<8x16xf32>
    %c0_17 = arith.constant 0 : index
    %c0_18 = arith.constant 0 : index
    %c0_19 = arith.constant 0 : index
    %40 = vector.load %arg1[%c0_17, %c0_18, %c0_19] : memref<2x8x32xf32, #tpu.memory_space<vmem>>, vector<1x8x16xf32>
    %41 = vector.shape_cast %40 : vector<1x8x16xf32> to vector<8x16xf32>
    %42 = arith.mulf %41, %39 : vector<8x16xf32>
    %c0_20 = arith.constant 0 : index
    %c0_21 = arith.constant 0 : index
    %c0_22 = arith.constant 0 : index
    %43 = vector.load %arg7[%c0_20, %c0_21, %c0_22] : memref<2x8x16xf32, #tpu.memory_space<vmem>>, vector<1x8x16xf32>
    %44 = vector.shape_cast %43 : vector<1x8x16xf32> to vector<8x16xf32>
    %45 = vector.shape_cast %42 : vector<8x16xf32> to vector<1x8x16xf32>
    tpu.vector_store %arg7[%c0_20, %c0_21, %c0_22], %45 {strides = array<i32>} : memref<2x8x16xf32, #tpu.memory_space<vmem>>, vector<1x8x16xf32>,
    %46 = vector.extract_strided_slice %29 {offsets = [1, 0, 0], sizes = [1, 8, 16], strides = [1, 1, 1]} : vector<2x8x16xf32> to vector<1x8x16xf32>
    %47 = vector.shape_cast %46 : vector<1x8x16xf32> to vector<8x16xf32>
    %cst_23 = arith.constant dense<0.000000e+00> : vector<8x16xf32>
    %48 = tpu.matmul %30, %47, %cst_23 {dimension_numbers = #tpu.dot_dimension_numbers<[1], [0], [0], [1], [0, 0, 1, 1], [], []>} : vector<8x8xf32>, vector<8x16xf32>, vector<8x16xf32> -> vector<8x16xf32>
    %49 = vector.broadcast %31 : vector<8x1xf32> to vector<8x16xf32>
    %50 = arith.addf %48, %49 : vector<8x16xf32>
    %c1 = arith.constant 1 : index
    %c0_24 = arith.constant 0 : index
    %c0_25 = arith.constant 0 : index
    %51 = vector.load %arg6[%c1, %c0_24, %c0_25] : memref<2x8x16xf32, #tpu.memory_space<vmem>>, vector<1x8x16xf32>
    %52 = vector.shape_cast %51 : vector<1x8x16xf32> to vector<8x16xf32>
    %53 = arith.addf %50, %52 : vector<8x16xf32>
    %c1_26 = arith.constant 1 : index
    %c0_27 = arith.constant 0 : index
    %c0_28 = arith.constant 0 : index
    %54 = vector.load %arg1[%c1_26, %c0_27, %c0_28] : memref<2x8x32xf32, #tpu.memory_space<vmem>>, vector<1x8x16xf32>
    %55 = vector.shape_cast %54 : vector<1x8x16xf32> to vector<8x16xf32>
    %56 = arith.mulf %55, %53 : vector<8x16xf32>
    %c1_29 = arith.constant 1 : index
    %c0_30 = arith.constant 0 : index
    %c0_31 = arith.constant 0 : index
    %57 = vector.load %arg7[%c1_29, %c0_30, %c0_31] : memref<2x8x16xf32, #tpu.memory_space<vmem>>, vector<1x8x16xf32>
    %58 = vector.shape_cast %57 : vector<1x8x16xf32> to vector<8x16xf32>
    %59 = vector.shape_cast %56 : vector<8x16xf32> to vector<1x8x16xf32>
    tpu.vector_store %arg7[%c1_29, %c0_30, %c0_31], %59 {strides = array<i32>} : memref<2x8x16xf32, #tpu.memory_space<vmem>>, vector<1x8x16xf32>,
    return
  }
  func.func @transform_0(%arg0: i32) -> (i32, i32, i32) {
    %c0_i32 = arith.constant 0 : i32
    %c0_i32_0 = arith.constant 0 : i32
    %c0_i32_1 = arith.constant 0 : i32
    return %arg0, %c0_i32, %c0_i32_0 : i32, i32, i32
  }
  func.func @transform_1(%arg0: i32) -> (i32, i32) {
    %c0_i32 = arith.constant 0 : i32
    %c0_i32_0 = arith.constant 0 : i32
    %c0_i32_1 = arith.constant 0 : i32
    return %c0_i32, %c0_i32_0 : i32, i32
  }
  func.func @transform_2(%arg0: i32) -> (i32, i32) {
    %c0_i32 = arith.constant 0 : i32
    %c0_i32_0 = arith.constant 0 : i32
    %c0_i32_1 = arith.constant 0 : i32
    return %c0_i32, %c0_i32_0 : i32, i32
  }
  func.func @transform_3(%arg0: i32) -> (i32, i32) {
    %c0_i32 = arith.constant 0 : i32
    %c0_i32_0 = arith.constant 0 : i32
    %c0_i32_1 = arith.constant 0 : i32
    return %c0_i32, %c0_i32_0 : i32, i32
  }
  func.func @transform_4(%arg0: i32) -> (i32, i32) {
    %c0_i32 = arith.constant 0 : i32
    %c0_i32_0 = arith.constant 0 : i32
    %c0_i32_1 = arith.constant 0 : i32
    return %c0_i32, %c0_i32_0 : i32, i32
  }
  func.func @transform_5(%arg0: i32) -> (i32, i32, i32) {
    %c0_i32 = arith.constant 0 : i32
    %c0_i32_0 = arith.constant 0 : i32
    %c0_i32_1 = arith.constant 0 : i32
    return %arg0, %c0_i32, %c0_i32_0 : i32, i32, i32
  }
  func.func @transform_6(%arg0: i32) -> (i32, i32, i32) {
    %c0_i32 = arith.constant 0 : i32
    %c0_i32_0 = arith.constant 0 : i32
    %c0_i32_1 = arith.constant 0 : i32
    return %arg0, %c0_i32, %c0_i32_0 : i32, i32, i32
  }
}

</mosaic_0001>

<llo_original>
// kernel: tpu_custom_call.1
$region0: #{tpu_custom_call.1}
  #allocation0 [shape = 'u32[]', space=smem, size = 0x4, offset = 0x4, fixed_abs, tag = 'smem constant byte address 0x4 - core index']
  #allocation1 [shape = 'u32[144,128]{1,0:T(1,128)}', space=vmem, size = 0x12000, scoped, tag = 'internal scratch']
  %s0 = inlined_call_operand.hbm [shape: f32[2,8,32], index: 0, kind: input, shape index: {}]
  %s1 = inlined_call_operand.hbm [shape: f32[8,8], index: 1, kind: input, shape index: {}]
  %s2 = inlined_call_operand.hbm [shape: f32[8,1], index: 2, kind: input, shape index: {}]
  %s3 = inlined_call_operand.hbm [shape: f32[1,16], index: 3, kind: input, shape index: {}]
  %s4 = inlined_call_operand.hbm [shape: f32[1,16], index: 4, kind: input, shape index: {}]
  %s5 = inlined_call_operand.hbm [shape: f32[2,8,16], index: 5, kind: input, shape index: {}]
  %s6 = inlined_call_operand.hbm [shape: f32[2,8,16], index: 6, kind: output, shape index: {}]
  %s7 = sld [smem:[#allocation0]]
  $region58: #{tpu_custom_call.1} parent=0
    _
  %s9 = ssub.s32 1, %s7
  %s10 = scalar_select 0, %s9, %s7
  $region1: #{tpu_custom_call.1} parent=0
    #allocation2 [shape = 'u8[8192]{0}', space=vmem, size = 0x2000, scoped, tag = 'input window, operand 0, single buffered']
    #allocation3 [shape = 's32[1]{0}', space=sflag, size = 0x4, scoped, tag = 'scoped memory for tpu_custom_call.1']
    #allocation4 [shape = 's32[1]{0}', space=sflag, size = 0x4, scoped, tag = 'scoped memory for tpu_custom_call.1']
    #allocation5 [shape = 'u8[4096]{0}', space=vmem, size = 0x1000, scoped, tag = 'input window, operand 1, single buffered']
    #allocation6 [shape = 's32[1]{0}', space=sflag, size = 0x4, scoped, tag = 'scoped memory for tpu_custom_call.1']
    #allocation7 [shape = 'u8[4096]{0}', space=vmem, size = 0x1000, scoped, tag = 'input window, operand 2, single buffered']
    #allocation8 [shape = 'u8[512]{0}', space=vmem, size = 0x400, scoped, tag = 'input window, operand 3, single buffered']
    #allocation9 [shape = 's32[1]{0}', space=sflag, size = 0x4, scoped, tag = 'scoped memory for tpu_custom_call.1']
    #allocation10 [shape = 'u8[512]{0}', space=vmem, size = 0x400, scoped, tag = 'input window, operand 4, single buffered']
    #allocation11 [shape = 'u8[8192]{0}', space=vmem, size = 0x2000, scoped, tag = 'input window, operand 5, single buffered']
    #allocation12 [shape = 's32[1]{0}', space=sflag, size = 0x4, scoped, tag = 'scoped memory for tpu_custom_call.1']
    #allocation13 [shape = 'u8[8192]{0}', space=vmem, size = 0x2000, scoped, tag = 'output window, operand 0, single buffered']
    %11 = vsyncpa [#allocation3], 0
    %12 = vsyncpa [#allocation6], 0
    %13 = vsyncpa [#allocation9], 0
    %14 = vsyncpa [#allocation12], 0
    %15 = vsyncpa [#allocation4], 0
    // Predicated region
    $region2: #{tpu_custom_call.1} parent=1 // pred_check
      _
    $region3: #{tpu_custom_call.1} parent=1 // pred_check_branch
      %17 = sbr.rel (0) target = $region5
    $region4: #{tpu_custom_call.1} parent=1 // pred_region
      %s19 = ssub.s32 256, 256
      %20 = vsyncadd [#allocation3], %s19
      %s21 = sshll.u32 [#allocation2], 4
      %s22 = int_to_ptr.vmem [resolvable:$true] %s21
      %27 = dma.hbm_to_vmem [thread:$0]  %s0, 256, %s22, [#allocation3], 128, 128, 8
    $region5: #{tpu_custom_call.1} parent=1 // pred_fallthru
      _
    // Predicated region
    $region6: #{tpu_custom_call.1} parent=1 // pred_check
      _
    $region7: #{tpu_custom_call.1} parent=1 // pred_check_branch
      %29 = sbr.rel (0) target = $region9
    $region8: #{tpu_custom_call.1} parent=1 // pred_region
      %s31 = ssub.s32 128, 128
      %32 = vsyncadd [#allocation6], %s31
      %s34 = sshll.u32 [#allocation5], 4
      %s35 = int_to_ptr.vmem [resolvable:$true] %s34
      %37 = dma.hbm_to_vmem [thread:$0]  %s1, 128, %s35, [#allocation6]
    $region9: #{tpu_custom_call.1} parent=1 // pred_fallthru
      _
    // Predicated region
    $region10: #{tpu_custom_call.1} parent=1 // pred_check
      _
    $region11: #{tpu_custom_call.1} parent=1 // pred_check_branch
      %39 = sbr.rel (0) target = $region13
    $region12: #{tpu_custom_call.1} parent=1 // pred_region
      %s41 = ssub.s32 128, 128
      %42 = vsyncadd [#allocation6], %s41
      %s44 = sshll.u32 [#allocation7], 4
      %s45 = int_to_ptr.vmem [resolvable:$true] %s44
      %47 = dma.hbm_to_vmem [thread:$0]  %s2, 128, %s45, [#allocation6]
    $region13: #{tpu_custom_call.1} parent=1 // pred_fallthru
      _
    // Predicated region
    $region14: #{tpu_custom_call.1} parent=1 // pred_check
      _
    $region15: #{tpu_custom_call.1} parent=1 // pred_check_branch
      %49 = sbr.rel (0) target = $region17
    $region16: #{tpu_custom_call.1} parent=1 // pred_region
      %s51 = ssub.s32 16, 16
      %52 = vsyncadd [#allocation9], %s51
      %s54 = sshll.u32 [#allocation8], 4
      %s55 = int_to_ptr.vmem [resolvable:$true] %s54
      %57 = dma.hbm_to_vmem [thread:$0]  %s3, 16, %s55, [#allocation9]
    $region17: #{tpu_custom_call.1} parent=1 // pred_fallthru
      _
    // Predicated region
    $region18: #{tpu_custom_call.1} parent=1 // pred_check
      _
    $region19: #{tpu_custom_call.1} parent=1 // pred_check_branch
      %59 = sbr.rel (0) target = $region21
    $region20: #{tpu_custom_call.1} parent=1 // pred_region
      %s61 = ssub.s32 16, 16
      %62 = vsyncadd [#allocation9], %s61
      %s64 = sshll.u32 [#allocation10], 4
      %s65 = int_to_ptr.vmem [resolvable:$true] %s64
      %67 = dma.hbm_to_vmem [thread:$0]  %s4, 16, %s65, [#allocation9]
    $region21: #{tpu_custom_call.1} parent=1 // pred_fallthru
      _
    // Predicated region
    $region22: #{tpu_custom_call.1} parent=1 // pred_check
      _
    $region23: #{tpu_custom_call.1} parent=1 // pred_check_branch
      %69 = sbr.rel (0) target = $region25
    $region24: #{tpu_custom_call.1} parent=1 // pred_region
      %s71 = ssub.s32 256, 256
      %72 = vsyncadd [#allocation12], %s71
      %s73 = sshll.u32 [#allocation11], 4
      %s74 = int_to_ptr.vmem [resolvable:$true] %s73
      %79 = dma.hbm_to_vmem [thread:$0]  %s5, 256, %s74, [#allocation12], 128, 128, 8
    $region25: #{tpu_custom_call.1} parent=1 // pred_fallthru
      _
    // Predicated region
    $region26: #{tpu_custom_call.1} parent=1 // pred_check
      _
    $region27: #{tpu_custom_call.1} parent=1 // pred_check_branch
      %81 = sbr.rel (0) target = $region29
    $region28: #{tpu_custom_call.1} parent=1 // pred_region
      %82 = dma.done [#allocation3], 256
    $region29: #{tpu_custom_call.1} parent=1 // pred_fallthru
      _
    // Predicated region
    $region30: #{tpu_custom_call.1} parent=1 // pred_check
      _
    $region31: #{tpu_custom_call.1} parent=1 // pred_check_branch
      %84 = sbr.rel (0) target = $region33
    $region32: #{tpu_custom_call.1} parent=1 // pred_region
      %85 = dma.done [#allocation6], 128
    $region33: #{tpu_custom_call.1} parent=1 // pred_fallthru
      _
    // Predicated region
    $region34: #{tpu_custom_call.1} parent=1 // pred_check
      _
    $region35: #{tpu_custom_call.1} parent=1 // pred_check_branch
      %87 = sbr.rel (0) target = $region37
    $region36: #{tpu_custom_call.1} parent=1 // pred_region
      %88 = dma.done [#allocation6], 128
    $region37: #{tpu_custom_call.1} parent=1 // pred_fallthru
      _
    // Predicated region
    $region38: #{tpu_custom_call.1} parent=1 // pred_check
      _
    $region39: #{tpu_custom_call.1} parent=1 // pred_check_branch
      %90 = sbr.rel (0) target = $region41
    $region40: #{tpu_custom_call.1} parent=1 // pred_region
      %91 = dma.done [#allocation9], 16
    $region41: #{tpu_custom_call.1} parent=1 // pred_fallthru
      _
    // Predicated region
    $region42: #{tpu_custom_call.1} parent=1 // pred_check
      _
    $region43: #{tpu_custom_call.1} parent=1 // pred_check_branch
      %93 = sbr.rel (0) target = $region45
    $region44: #{tpu_custom_call.1} parent=1 // pred_region
      %94 = dma.done [#allocation9], 16
    $region45: #{tpu_custom_call.1} parent=1 // pred_fallthru
      _
    // Predicated region
    $region46: #{tpu_custom_call.1} parent=1 // pred_check
      _
    $region47: #{tpu_custom_call.1} parent=1 // pred_check_branch
      %96 = sbr.rel (0) target = $region49
    $region48: #{tpu_custom_call.1} parent=1 // pred_region
      %97 = dma.done [#allocation12], 256
    $region49: #{tpu_custom_call.1} parent=1 // pred_fallthru
      _
    %v98 = vld [vmem:[#allocation2] sm:$0xff]
    %v99 = vld [vmem:[#allocation2 + $0x8] sm:$0xff]
    %102 = vrot.lane.b32.xlu0 %v98, 112
    %v103 = vpop.permute.xlu0 %102
    %104 = vrot.lane.b32.xlu0 %v99, 112
    %v105 = vpop.permute.xlu0 %104
    %vm108 = vcmask 130048
    %v109 = vsel %vm108, %v103, 0.0
    %110 = vadd.xlane.f32.xlu0 %v109
    %v111 = vpop.xlane.xlu0 %110
    %v112 = vsel %vm108, %v105, 0.0
    %113 = vadd.xlane.f32.xlu0 %v112
    %v114 = vpop.xlane.xlu0 %113
    %v115 = vrcp.pop 16.0
    %v116 = vmul.f32 %v111, %v115
    %v117 = vmul.f32 %v114, %v115
    %v118 = vmul.f32 %v98, %v98
    %v119 = vmul.f32 %v99, %v99
    %122 = vrot.lane.b32.xlu0 %v118, 112
    %v123 = vpop.permute.xlu0 %122
    %124 = vrot.lane.b32.xlu0 %v119, 112
    %v125 = vpop.permute.xlu0 %124
    %v128 = vsel %vm108, %v123, 0.0
    %129 = vadd.xlane.f32.xlu0 %v128
    %v130 = vpop.xlane.xlu0 %129
    %v131 = vsel %vm108, %v125, 0.0
    %132 = vadd.xlane.f32.xlu0 %v131
    %v133 = vpop.xlane.xlu0 %132
    %v134 = vmul.f32 %v130, %v115
    %v135 = vmul.f32 %v133, %v115
    %v136 = vmul.f32 %v116, %v116
    %v137 = vmul.f32 %v117, %v117
    %v138 = vsub.f32 %v134, %v136
    %v139 = vsub.f32 %v135, %v137
    %v140 = vadd.f32 %v138, 1e-05
    %v141 = vadd.f32 %v139, 1e-05
    %v142 = vrsqrt.pop %v140
    %v143 = vrsqrt.pop %v141
    %v144 = vld [vmem:[#allocation8] sm:$0x1]
    %v145 = vld [vmem:[#allocation10] sm:$0x1]
    %v147 = vlaneseq
    %v148 = vshrl.u32 %v147, 7
    %v149 = vsub.s32 0, %v148
    %v150 = vrot.slane %v144, %v149
    %v152 = vmul.f32 %v150, %v142
    %v153 = vmul.f32 %v150, %v143
    %v154 = vmul.f32 %v116, %v152
    %v155 = vmul.f32 %v117, %v153
    %v157 = vlaneseq
    %v158 = vshrl.u32 %v157, 7
    %v159 = vsub.s32 0, %v158
    %v160 = vrot.slane %v145, %v159
    %v162 = vsub.f32 %v160, %v154
    %v163 = vsub.f32 %v160, %v155
    %166 = vrot.lane.b32.xlu0 %v152, 16
    %v167 = vpop.permute.xlu0 %166
    %168 = vrot.lane.b32.xlu0 %v153, 16
    %v169 = vpop.permute.xlu0 %168
    %v172 = vmul.f32 %v98, %v167
    %v173 = vmul.f32 %v99, %v169
    %176 = vrot.lane.b32.xlu0 %v162, 16
    %v177 = vpop.permute.xlu0 %176
    %178 = vrot.lane.b32.xlu0 %v163, 16
    %v179 = vpop.permute.xlu0 %178
    %v182 = vadd.f32 %v172, %v177
    %v183 = vadd.f32 %v173, %v179
    %v184 = vld [vmem:[#allocation5] sm:$0xff]
    %v185 = vld [vmem:[#allocation7] sm:$0xff]
    %187 = vset.pattern.permute.xlu0 0
    %188 = vperm.xlu0 %187, %v185
    %v189 = vpop.permute.xlu0 %188
    %192 = vrot.lane.b32.xlu0 %v182, 112
    %v193 = vpop.permute.xlu0 %192
    %vm195 = vcmask 64512
    %v197 = vsel %vm195, %v184, 0
    %199 = vmatprep.subr.mxu0 0.0
    %200 = vmatpush1.msra.mxu0 %v193
    %201 = vmatprep.subr.mxu0 0.0
    %202 = vmatpush1.msra.mxu0 0.0
    %203 = vmatprep.subr.mxu0 0.0
    %204 = vmatpush1.msra.mxu0 0.0
    %205 = vmatprep.subr.mxu0 0.0
    %206 = vmatpush1.msra.mxu0 0.0
    %207 = vmatprep.subr.mxu0 0.0
    %208 = vmatpush1.msra.mxu0 0.0
    %209 = vmatprep.subr.mxu0 0.0
    %210 = vmatpush1.msra.mxu0 0.0
    %211 = vmatprep.subr.mxu0 0.0
    %212 = vmatpush1.msra.mxu0 0.0
    %213 = vmatprep.subr.mxu0 0.0
    %214 = vmatpush1.msra.mxu0 0.0
    %215 = vmatprep.subr.mxu0 0.0
    %216 = vmatpush1.msra.mxu0 0.0
    %217 = vmatprep.subr.mxu0 0.0
    %218 = vmatpush1.msra.mxu0 0.0
    %219 = vmatprep.subr.mxu0 0.0
    %220 = vmatpush1.msra.mxu0 0.0
    %221 = vmatprep.subr.mxu0 0.0
    %222 = vmatpush1.msra.mxu0 0.0
    %223 = vmatprep.subr.mxu0 0.0
    %224 = vmatpush1.msra.mxu0 0.0
    %225 = vmatprep.subr.mxu0 0.0
    %226 = vmatpush1.msra.mxu0 0.0
    %227 = vmatprep.subr.mxu0 0.0
    %228 = vmatpush1.msra.mxu0 0.0
    %229 = vmatprep.subr.mxu0 0.0
    %230 = vmatpush1.msra.mxu0 0.0
    %231 = vmatprep.subr.mxu0 0.0
    %232 = vmatpush1.msra.mxu0 0.0
    %233 = vmatprep.subr.mxu0 0.0
    %234 = vmatpush1.msra.mxu0 0.0
    %235 = vmatprep.subr.mxu0 0.0
    %236 = vmatpush1.msra.mxu0 0.0
    %237 = vmatprep.subr.mxu0 0.0
    %238 = vmatpush1.msra.mxu0 0.0
    %239 = vmatprep.subr.mxu0 0.0
    %240 = vmatpush1.msra.mxu0 0.0
    %241 = vmatprep.subr.mxu0 0.0
    %242 = vmatpush1.msra.mxu0 0.0
    %243 = vmatprep.subr.mxu0 0.0
    %244 = vmatpush1.msra.mxu0 0.0
    %245 = vmatprep.subr.mxu0 0.0
    %246 = vmatpush1.msra.mxu0 0.0
    %247 = vmatprep.subr.mxu0 0.0
    %248 = vmatpush1.msra.mxu0 0.0
    %249 = vmatprep.subr.mxu0 0.0
    %250 = vmatpush1.msra.mxu0 0.0
    %251 = vmatprep.subr.mxu0 0.0
    %252 = vmatpush1.msra.mxu0 0.0
    %253 = vmatprep.subr.mxu0 0.0
    %254 = vmatpush1.msra.mxu0 0.0
    %255 = vmatprep.subr.mxu0 0.0
    %256 = vmatpush1.msra.mxu0 0.0
    %257 = vmatprep.subr.mxu0 0.0
    %258 = vmatpush1.msra.mxu0 0.0
    %259 = vmatprep.subr.mxu0 0.0
    %260 = vmatpush1.msra.mxu0 0.0
    %261 = vmatprep.subr.mxu0 0.0
    %262 = vmatpush1.msra.mxu0 0.0
    %263 = vmatprep.mubr.f32.mxu0 0.0
    %264 = vmatmul.mubr.f32.gmra.mrb[0].mxu0 %v197
    %v265 = vpop.f32.mrb[0].mxu0
    %v266 = vadd.f32 %v189, %v265
    %v267 = vpop.f32.mrb[0].mxu0
    %268 = vdwg.mxu0
    %v269 = vld [vmem:[#allocation11] sm:$0xff]
    %v270 = vadd.f32 %v266, %v269
    %v271 = vld [vmem:[#allocation2] sm:$0xff]
    %v272 = vmul.f32 %v271, %v270
    %273 = vst.msk [vmem:[#allocation13] sm:$0xff] %vm108, %v272
    %275 = vrot.lane.b32.xlu0 %v183, 112
    %v276 = vpop.permute.xlu0 %275
    %278 = vmatprep.subr.mxu0 0.0
    %279 = vmatpush1.msra.mxu0 %v276
    %280 = vmatprep.subr.mxu0 0.0
    %281 = vmatpush1.msra.mxu0 0.0
    %282 = vmatprep.subr.mxu0 0.0
    %283 = vmatpush1.msra.mxu0 0.0
    %284 = vmatprep.subr.mxu0 0.0
    %285 = vmatpush1.msra.mxu0 0.0
    %286 = vmatprep.subr.mxu0 0.0
    %287 = vmatpush1.msra.mxu0 0.0
    %288 = vmatprep.subr.mxu0 0.0
    %289 = vmatpush1.msra.mxu0 0.0
    %290 = vmatprep.subr.mxu0 0.0
    %291 = vmatpush1.msra.mxu0 0.0
    %292 = vmatprep.subr.mxu0 0.0
    %293 = vmatpush1.msra.mxu0 0.0
    %294 = vmatprep.subr.mxu0 0.0
    %295 = vmatpush1.msra.mxu0 0.0
    %296 = vmatprep.subr.mxu0 0.0
    %297 = vmatpush1.msra.mxu0 0.0
    %298 = vmatprep.subr.mxu0 0.0
    %299 = vmatpush1.msra.mxu0 0.0
    %300 = vmatprep.subr.mxu0 0.0
    %301 = vmatpush1.msra.mxu0 0.0
    %302 = vmatprep.subr.mxu0 0.0
    %303 = vmatpush1.msra.mxu0 0.0
    %304 = vmatprep.subr.mxu0 0.0
    %305 = vmatpush1.msra.mxu0 0.0
    %306 = vmatprep.subr.mxu0 0.0
    %307 = vmatpush1.msra.mxu0 0.0
    %308 = vmatprep.subr.mxu0 0.0
    %309 = vmatpush1.msra.mxu0 0.0
    %310 = vmatprep.subr.mxu0 0.0
    %311 = vmatpush1.msra.mxu0 0.0
    %312 = vmatprep.subr.mxu0 0.0
    %313 = vmatpush1.msra.mxu0 0.0
    %314 = vmatprep.subr.mxu0 0.0
    %315 = vmatpush1.msra.mxu0 0.0
    %316 = vmatprep.subr.mxu0 0.0
    %317 = vmatpush1.msra.mxu0 0.0
    %318 = vmatprep.subr.mxu0 0.0
    %319 = vmatpush1.msra.mxu0 0.0
    %320 = vmatprep.subr.mxu0 0.0
    %321 = vmatpush1.msra.mxu0 0.0
    %322 = vmatprep.subr.mxu0 0.0
    %323 = vmatpush1.msra.mxu0 0.0
    %324 = vmatprep.subr.mxu0 0.0
    %325 = vmatpush1.msra.mxu0 0.0
    %326 = vmatprep.subr.mxu0 0.0
    %327 = vmatpush1.msra.mxu0 0.0
    %328 = vmatprep.subr.mxu0 0.0
    %329 = vmatpush1.msra.mxu0 0.0
    %330 = vmatprep.subr.mxu0 0.0
    %331 = vmatpush1.msra.mxu0 0.0
    %332 = vmatprep.subr.mxu0 0.0
    %333 = vmatpush1.msra.mxu0 0.0
    %334 = vmatprep.subr.mxu0 0.0
    %335 = vmatpush1.msra.mxu0 0.0
    %336 = vmatprep.subr.mxu0 0.0
    %337 = vmatpush1.msra.mxu0 0.0
    %338 = vmatprep.subr.mxu0 0.0
    %339 = vmatpush1.msra.mxu0 0.0
    %340 = vmatprep.subr.mxu0 0.0
    %341 = vmatpush1.msra.mxu0 0.0
    %342 = vmatprep.mubr.f32.mxu0 0.0
    %343 = vmatmul.mubr.f32.gmra.mrb[0].mxu0 %v197
    %v344 = vpop.f32.mrb[0].mxu0
    %v345 = vadd.f32 %v189, %v344
    %v346 = vpop.f32.mrb[0].mxu0
    %347 = vdwg.mxu0
    %s348 = scalar_lea.vmem [#allocation11], 8
    %v349 = vld [vmem:[%s348] sm:$0xff]
    %v350 = vadd.f32 %v345, %v349
    %s351 = scalar_lea.vmem [#allocation2], 8
    %v352 = vld [vmem:[%s351] sm:$0xff]
    %v353 = vmul.f32 %v352, %v350
    %s354 = scalar_lea.vmem [#allocation13], 8
    %355 = vst.msk [vmem:[%s354] sm:$0xff] %vm108, %v353
    // Predicated region
    $region50: #{tpu_custom_call.1} parent=1 // pred_check
      _
    $region51: #{tpu_custom_call.1} parent=1 // pred_check_branch
      %357 = sbr.rel (0) target = $region53
    $region52: #{tpu_custom_call.1} parent=1 // pred_region
      %s359 = ssub.s32 256, 256
      %360 = vsyncadd [#allocation4], %s359
      %s361 = sshll.u32 [#allocation13], 4
      %s362 = int_to_ptr.vmem [resolvable:$true] %s361
      %367 = dma.vmem_to_hbm [thread:$0]  %s362, 256, %s6, [#allocation4], 128, 128, 8
    $region53: #{tpu_custom_call.1} parent=1 // pred_fallthru
      _
    // Predicated region
    $region54: #{tpu_custom_call.1} parent=1 // pred_check
      _
    $region55: #{tpu_custom_call.1} parent=1 // pred_check_branch
      %369 = sbr.rel (0) target = $region57
    $region56: #{tpu_custom_call.1} parent=1 // pred_region
      %370 = dma.done [#allocation4], 256
    $region57: #{tpu_custom_call.1} parent=1 // pred_fallthru
      _
    %371 = vsyncpa [#allocation3], 1
    %372 = vsyncpa [#allocation6], 1
    %373 = vsyncpa [#allocation9], 1
    %374 = vsyncpa [#allocation12], 1
    %375 = vsyncpa [#allocation4], 1

// kernel: tpu_custom_call.1
$region0: #{tpu_custom_call.1}
  #allocation0 [shape = 'u32[]', space=smem, size = 0x4, offset = 0x4, fixed_abs, tag = 'smem constant byte address 0x4 - core index']
  #allocation1 [shape = 'u32[144,128]{1,0:T(1,128)}', space=vmem, size = 0x12000, scoped, tag = 'internal scratch']
  %s0 = inlined_call_operand.hbm [shape: f32[2,8,32], index: 0, kind: input, shape index: {}]
  %s1 = inlined_call_operand.hbm [shape: f32[8,8], index: 1, kind: input, shape index: {}]
  %s2 = inlined_call_operand.hbm [shape: f32[8,1], index: 2, kind: input, shape index: {}]
  %s3 = inlined_call_operand.hbm [shape: f32[1,16], index: 3, kind: input, shape index: {}]
  %s4 = inlined_call_operand.hbm [shape: f32[1,16], index: 4, kind: input, shape index: {}]
  %s5 = inlined_call_operand.hbm [shape: f32[2,8,16], index: 5, kind: input, shape index: {}]
  %s6 = inlined_call_operand.hbm [shape: f32[2,8,16], index: 6, kind: output, shape index: {}]
  %s7 = sld [smem:[#allocation0]]
  $region58: #{tpu_custom_call.1} parent=0
    _
  %s9 = ssub.s32 1, %s7
  %s10 = scalar_select 0, %s9, %s7
  $region1: #{tpu_custom_call.1} parent=0
    #allocation2 [shape = 'u8[8192]{0}', space=vmem, size = 0x2000, scoped, tag = 'input window, operand 0, single buffered']
    #allocation3 [shape = 's32[1]{0}', space=sflag, size = 0x4, scoped, tag = 'scoped memory for tpu_custom_call.1']
    #allocation4 [shape = 's32[1]{0}', space=sflag, size = 0x4, scoped, tag = 'scoped memory for tpu_custom_call.1']
    #allocation5 [shape = 'u8[4096]{0}', space=vmem, size = 0x1000, scoped, tag = 'input window, operand 1, single buffered']
    #allocation6 [shape = 's32[1]{0}', space=sflag, size = 0x4, scoped, tag = 'scoped memory for tpu_custom_call.1']
    #allocation7 [shape = 'u8[4096]{0}', space=vmem, size = 0x1000, scoped, tag = 'input window, operand 2, single buffered']
    #allocation8 [shape = 'u8[512]{0}', space=vmem, size = 0x400, scoped, tag = 'input window, operand 3, single buffered']
    #allocation9 [shape = 's32[1]{0}', space=sflag, size = 0x4, scoped, tag = 'scoped memory for tpu_custom_call.1']
    #allocation10 [shape = 'u8[512]{0}', space=vmem, size = 0x400, scoped, tag = 'input window, operand 4, single buffered']
    #allocation11 [shape = 'u8[8192]{0}', space=vmem, size = 0x2000, scoped, tag = 'input window, operand 5, single buffered']
    #allocation12 [shape = 's32[1]{0}', space=sflag, size = 0x4, scoped, tag = 'scoped memory for tpu_custom_call.1']
    #allocation13 [shape = 'u8[8192]{0}', space=vmem, size = 0x2000, scoped, tag = 'output window, operand 0, single buffered']
    %11 = vsyncpa [#allocation3], 0
    %12 = vsyncpa [#allocation6], 0
    %13 = vsyncpa [#allocation9], 0
    %14 = vsyncpa [#allocation12], 0
    %15 = vsyncpa [#allocation4], 0
    // Predicated region
    $region2: #{tpu_custom_call.1} parent=1 // pred_check
      _
    $region3: #{tpu_custom_call.1} parent=1 // pred_check_branch
      %17 = sbr.rel (0) target = $region5
    $region4: #{tpu_custom_call.1} parent=1 // pred_region
      %s19 = ssub.s32 256, 256
      %20 = vsyncadd [#allocation3], %s19
      %s21 = sshll.u32 [#allocation2], 4
      %s22 = int_to_ptr.vmem [resolvable:$true] %s21
      %27 = dma.hbm_to_vmem [thread:$0]  %s0, 256, %s22, [#allocation3], 128, 128, 8
    $region5: #{tpu_custom_call.1} parent=1 // pred_fallthru
      _
    // Predicated region
    $region6: #{tpu_custom_call.1} parent=1 // pred_check
      _
    $region7: #{tpu_custom_call.1} parent=1 // pred_check_branch
      %29 = sbr.rel (0) target = $region9
    $region8: #{tpu_custom_call.1} parent=1 // pred_region
      %s31 = ssub.s32 128, 128
      %32 = vsyncadd [#allocation6], %s31
      %s34 = sshll.u32 [#allocation5], 4
      %s35 = int_to_ptr.vmem [resolvable:$true] %s34
      %37 = dma.hbm_to_vmem [thread:$0]  %s1, 128, %s35, [#allocation6]
    $region9: #{tpu_custom_call.1} parent=1 // pred_fallthru
      _
    // Predicated region
    $region10: #{tpu_custom_call.1} parent=1 // pred_check
      _
    $region11: #{tpu_custom_call.1} parent=1 // pred_check_branch
      %39 = sbr.rel (0) target = $region13
    $region12: #{tpu_custom_call.1} parent=1 // pred_region
      %s41 = ssub.s32 128, 128
      %42 = vsyncadd [#allocation6], %s41
      %s44 = sshll.u32 [#allocation7], 4
      %s45 = int_to_ptr.vmem [resolvable:$true] %s44
      %47 = dma.hbm_to_vmem [thread:$0]  %s2, 128, %s45, [#allocation6]
    $region13: #{tpu_custom_call.1} parent=1 // pred_fallthru
      _
    // Predicated region
    $region14: #{tpu_custom_call.1} parent=1 // pred_check
      _
    $region15: #{tpu_custom_call.1} parent=1 // pred_check_branch
      %49 = sbr.rel (0) target = $region17
    $region16: #{tpu_custom_call.1} parent=1 // pred_region
      %s51 = ssub.s32 16, 16
      %52 = vsyncadd [#allocation9], %s51
      %s54 = sshll.u32 [#allocation8], 4
      %s55 = int_to_ptr.vmem [resolvable:$true] %s54
      %57 = dma.hbm_to_vmem [thread:$0]  %s3, 16, %s55, [#allocation9]
    $region17: #{tpu_custom_call.1} parent=1 // pred_fallthru
      _
    // Predicated region
    $region18: #{tpu_custom_call.1} parent=1 // pred_check
      _
    $region19: #{tpu_custom_call.1} parent=1 // pred_check_branch
      %59 = sbr.rel (0) target = $region21
    $region20: #{tpu_custom_call.1} parent=1 // pred_region
      %s61 = ssub.s32 16, 16
      %62 = vsyncadd [#allocation9], %s61
      %s64 = sshll.u32 [#allocation10], 4
      %s65 = int_to_ptr.vmem [resolvable:$true] %s64
      %67 = dma.hbm_to_vmem [thread:$0]  %s4, 16, %s65, [#allocation9]
    $region21: #{tpu_custom_call.1} parent=1 // pred_fallthru
      _
    // Predicated region
    $region22: #{tpu_custom_call.1} parent=1 // pred_check
      _
    $region23: #{tpu_custom_call.1} parent=1 // pred_check_branch
      %69 = sbr.rel (0) target = $region25
    $region24: #{tpu_custom_call.1} parent=1 // pred_region
      %s71 = ssub.s32 256, 256
      %72 = vsyncadd [#allocation12], %s71
      %s73 = sshll.u32 [#allocation11], 4
      %s74 = int_to_ptr.vmem [resolvable:$true] %s73
      %79 = dma.hbm_to_vmem [thread:$0]  %s5, 256, %s74, [#allocation12], 128, 128, 8
    $region25: #{tpu_custom_call.1} parent=1 // pred_fallthru
      _
    // Predicated region
    $region26: #{tpu_custom_call.1} parent=1 // pred_check
      _
    $region27: #{tpu_custom_call.1} parent=1 // pred_check_branch
      %81 = sbr.rel (0) target = $region29
    $region28: #{tpu_custom_call.1} parent=1 // pred_region
      %82 = dma.done [#allocation3], 256
    $region29: #{tpu_custom_call.1} parent=1 // pred_fallthru
      _
    // Predicated region
    $region30: #{tpu_custom_call.1} parent=1 // pred_check
      _
    $region31: #{tpu_custom_call.1} parent=1 // pred_check_branch
      %84 = sbr.rel (0) target = $region33
    $region32: #{tpu_custom_call.1} parent=1 // pred_region
      %85 = dma.done [#allocation6], 128
    $region33: #{tpu_custom_call.1} parent=1 // pred_fallthru
      _
    // Predicated region
    $region34: #{tpu_custom_call.1} parent=1 // pred_check
      _
    $region35: #{tpu_custom_call.1} parent=1 // pred_check_branch
      %87 = sbr.rel (0) target = $region37
    $region36: #{tpu_custom_call.1} parent=1 // pred_region
      %88 = dma.done [#allocation6], 128
    $region37: #{tpu_custom_call.1} parent=1 // pred_fallthru
      _
    // Predicated region
    $region38: #{tpu_custom_call.1} parent=1 // pred_check
      _
    $region39: #{tpu_custom_call.1} parent=1 // pred_check_branch
      %90 = sbr.rel (0) target = $region41
    $region40: #{tpu_custom_call.1} parent=1 // pred_region
      %91 = dma.done [#allocation9], 16
    $region41: #{tpu_custom_call.1} parent=1 // pred_fallthru
      _
    // Predicated region
    $region42: #{tpu_custom_call.1} parent=1 // pred_check
      _
    $region43: #{tpu_custom_call.1} parent=1 // pred_check_branch
      %93 = sbr.rel (0) target = $region45
    $region44: #{tpu_custom_call.1} parent=1 // pred_region
      %94 = dma.done [#allocation9], 16
    $region45: #{tpu_custom_call.1} parent=1 // pred_fallthru
      _
    // Predicated region
    $region46: #{tpu_custom_call.1} parent=1 // pred_check
      _
    $region47: #{tpu_custom_call.1} parent=1 // pred_check_branch
      %96 = sbr.rel (0) target = $region49
    $region48: #{tpu_custom_call.1} parent=1 // pred_region
      %97 = dma.done [#allocation12], 256
    $region49: #{tpu_custom_call.1} parent=1 // pred_fallthru
      _
    %v98 = vld [vmem:[#allocation2] sm:$0xff]
    %v99 = vld [vmem:[#allocation2 + $0x8] sm:$0xff]
    %102 = vrot.lane.b32.xlu0 %v98, 112
    %v103 = vpop.permute.xlu0 %102
    %104 = vrot.lane.b32.xlu0 %v99, 112
    %v105 = vpop.permute.xlu0 %104
    %vm108 = vcmask 130048
    %v109 = vsel %vm108, %v103, 0.0
    %110 = vadd.xlane.f32.xlu0 %v109
    %v111 = vpop.xlane.xlu0 %110
    %v112 = vsel %vm108, %v105, 0.0
    %113 = vadd.xlane.f32.xlu0 %v112
    %v114 = vpop.xlane.xlu0 %113
    %v115 = vrcp.pop 16.0
    %v116 = vmul.f32 %v111, %v115
    %v117 = vmul.f32 %v114, %v115
    %v118 = vmul.f32 %v98, %v98
    %v119 = vmul.f32 %v99, %v99
    %122 = vrot.lane.b32.xlu0 %v118, 112
    %v123 = vpop.permute.xlu0 %122
    %124 = vrot.lane.b32.xlu0 %v119, 112
    %v125 = vpop.permute.xlu0 %124
    %v128 = vsel %vm108, %v123, 0.0
    %129 = vadd.xlane.f32.xlu0 %v128
    %v130 = vpop.xlane.xlu0 %129
    %v131 = vsel %vm108, %v125, 0.0
    %132 = vadd.xlane.f32.xlu0 %v131
    %v133 = vpop.xlane.xlu0 %132
    %v134 = vmul.f32 %v130, %v115
    %v135 = vmul.f32 %v133, %v115
    %v136 = vmul.f32 %v116, %v116
    %v137 = vmul.f32 %v117, %v117
    %v138 = vsub.f32 %v134, %v136
    %v139 = vsub.f32 %v135, %v137
    %v140 = vadd.f32 %v138, 1e-05
    %v141 = vadd.f32 %v139, 1e-05
    %v142 = vrsqrt.pop %v140
    %v143 = vrsqrt.pop %v141
    %v144 = vld [vmem:[#allocation8] sm:$0x1]
    %v145 = vld [vmem:[#allocation10] sm:$0x1]
    %v147 = vlaneseq
    %v148 = vshrl.u32 %v147, 7
    %v149 = vsub.s32 0, %v148
    %v150 = vrot.slane %v144, %v149
    %v152 = vmul.f32 %v150, %v142
    %v153 = vmul.f32 %v150, %v143
    %v154 = vmul.f32 %v116, %v152
    %v155 = vmul.f32 %v117, %v153
    %v157 = vlaneseq
    %v158 = vshrl.u32 %v157, 7
    %v159 = vsub.s32 0, %v158
    %v160 = vrot.slane %v145, %v159
    %v162 = vsub.f32 %v160, %v154
    %v163 = vsub.f32 %v160, %v155
    %166 = vrot.lane.b32.xlu0 %v152, 16
    %v167 = vpop.permute.xlu0 %166
    %168 = vrot.lane.b32.xlu0 %v153, 16
    %v169 = vpop.permute.xlu0 %168
    %v172 = vmul.f32 %v98, %v167
    %v173 = vmul.f32 %v99, %v169
    %176 = vrot.lane.b32.xlu0 %v162, 16
    %v177 = vpop.permute.xlu0 %176
    %178 = vrot.lane.b32.xlu0 %v163, 16
    %v179 = vpop.permute.xlu0 %178
    %v182 = vadd.f32 %v172, %v177
    %v183 = vadd.f32 %v173, %v179
    %v184 = vld [vmem:[#allocation5] sm:$0xff]
    %v185 = vld [vmem:[#allocation7] sm:$0xff]
    %187 = vset.pattern.permute.xlu0 0
    %188 = vperm.xlu0 %187, %v185
    %v189 = vpop.permute.xlu0 %188
    %192 = vrot.lane.b32.xlu0 %v182, 112
    %v193 = vpop.permute.xlu0 %192
    %vm195 = vcmask 64512
    %v197 = vsel %vm195, %v184, 0
    %199 = vmatprep.subr.mxu0 0.0
    %200 = vmatpush1.msra.mxu0 %v193
    %201 = vmatprep.subr.mxu0 0.0
    %202 = vmatpush1.msra.mxu0 0.0
    %203 = vmatprep.subr.mxu0 0.0
    %204 = vmatpush1.msra.mxu0 0.0
    %205 = vmatprep.subr.mxu0 0.0
    %206 = vmatpush1.msra.mxu0 0.0
    %207 = vmatprep.subr.mxu0 0.0
    %208 = vmatpush1.msra.mxu0 0.0
    %209 = vmatprep.subr.mxu0 0.0
    %210 = vmatpush1.msra.mxu0 0.0
    %211 = vmatprep.subr.mxu0 0.0
    %212 = vmatpush1.msra.mxu0 0.0
    %213 = vmatprep.subr.mxu0 0.0
    %214 = vmatpush1.msra.mxu0 0.0
    %215 = vmatprep.subr.mxu0 0.0
    %216 = vmatpush1.msra.mxu0 0.0
    %217 = vmatprep.subr.mxu0 0.0
    %218 = vmatpush1.msra.mxu0 0.0
    %219 = vmatprep.subr.mxu0 0.0
    %220 = vmatpush1.msra.mxu0 0.0
    %221 = vmatprep.subr.mxu0 0.0
    %222 = vmatpush1.msra.mxu0 0.0
    %223 = vmatprep.subr.mxu0 0.0
    %224 = vmatpush1.msra.mxu0 0.0
    %225 = vmatprep.subr.mxu0 0.0
    %226 = vmatpush1.msra.mxu0 0.0
    %227 = vmatprep.subr.mxu0 0.0
    %228 = vmatpush1.msra.mxu0 0.0
    %229 = vmatprep.subr.mxu0 0.0
    %230 = vmatpush1.msra.mxu0 0.0
    %231 = vmatprep.subr.mxu0 0.0
    %232 = vmatpush1.msra.mxu0 0.0
    %233 = vmatprep.subr.mxu0 0.0
    %234 = vmatpush1.msra.mxu0 0.0
    %235 = vmatprep.subr.mxu0 0.0
    %236 = vmatpush1.msra.mxu0 0.0
    %237 = vmatprep.subr.mxu0 0.0
    %238 = vmatpush1.msra.mxu0 0.0
    %239 = vmatprep.subr.mxu0 0.0
    %240 = vmatpush1.msra.mxu0 0.0
    %241 = vmatprep.subr.mxu0 0.0
    %242 = vmatpush1.msra.mxu0 0.0
    %243 = vmatprep.subr.mxu0 0.0
    %244 = vmatpush1.msra.mxu0 0.0
    %245 = vmatprep.subr.mxu0 0.0
    %246 = vmatpush1.msra.mxu0 0.0
    %247 = vmatprep.subr.mxu0 0.0
    %248 = vmatpush1.msra.mxu0 0.0
    %249 = vmatprep.subr.mxu0 0.0
    %250 = vmatpush1.msra.mxu0 0.0
    %251 = vmatprep.subr.mxu0 0.0
    %252 = vmatpush1.msra.mxu0 0.0
    %253 = vmatprep.subr.mxu0 0.0
    %254 = vmatpush1.msra.mxu0 0.0
    %255 = vmatprep.subr.mxu0 0.0
    %256 = vmatpush1.msra.mxu0 0.0
    %257 = vmatprep.subr.mxu0 0.0
    %258 = vmatpush1.msra.mxu0 0.0
    %259 = vmatprep.subr.mxu0 0.0
    %260 = vmatpush1.msra.mxu0 0.0
    %261 = vmatprep.subr.mxu0 0.0
    %262 = vmatpush1.msra.mxu0 0.0
    %263 = vmatprep.mubr.f32.mxu0 0.0
    %264 = vmatmul.mubr.f32.gmra.mrb[0].mxu0 %v197
    %v265 = vpop.f32.mrb[0].mxu0
    %v266 = vadd.f32 %v189, %v265
    %v267 = vpop.f32.mrb[0].mxu0
    %268 = vdwg.mxu0
    %v269 = vld [vmem:[#allocation11] sm:$0xff]
    %v270 = vadd.f32 %v266, %v269
    %v271 = vld [vmem:[#allocation2] sm:$0xff]
    %v272 = vmul.f32 %v271, %v270
    %273 = vst.msk [vmem:[#allocation13] sm:$0xff] %vm108, %v272
    %275 = vrot.lane.b32.xlu0 %v183, 112
    %v276 = vpop.permute.xlu0 %275
    %278 = vmatprep.subr.mxu0 0.0
    %279 = vmatpush1.msra.mxu0 %v276
    %280 = vmatprep.subr.mxu0 0.0
    %281 = vmatpush1.msra.mxu0 0.0
    %282 = vmatprep.subr.mxu0 0.0
    %283 = vmatpush1.msra.mxu0 0.0
    %284 = vmatprep.subr.mxu0 0.0
    %285 = vmatpush1.msra.mxu0 0.0
    %286 = vmatprep.subr.mxu0 0.0
    %287 = vmatpush1.msra.mxu0 0.0
    %288 = vmatprep.subr.mxu0 0.0
    %289 = vmatpush1.msra.mxu0 0.0
    %290 = vmatprep.subr.mxu0 0.0
    %291 = vmatpush1.msra.mxu0 0.0
    %292 = vmatprep.subr.mxu0 0.0
    %293 = vmatpush1.msra.mxu0 0.0
    %294 = vmatprep.subr.mxu0 0.0
    %295 = vmatpush1.msra.mxu0 0.0
    %296 = vmatprep.subr.mxu0 0.0
    %297 = vmatpush1.msra.mxu0 0.0
    %298 = vmatprep.subr.mxu0 0.0
    %299 = vmatpush1.msra.mxu0 0.0
    %300 = vmatprep.subr.mxu0 0.0
    %301 = vmatpush1.msra.mxu0 0.0
    %302 = vmatprep.subr.mxu0 0.0
    %303 = vmatpush1.msra.mxu0 0.0
    %304 = vmatprep.subr.mxu0 0.0
    %305 = vmatpush1.msra.mxu0 0.0
    %306 = vmatprep.subr.mxu0 0.0
    %307 = vmatpush1.msra.mxu0 0.0
    %308 = vmatprep.subr.mxu0 0.0
    %309 = vmatpush1.msra.mxu0 0.0
    %310 = vmatprep.subr.mxu0 0.0
    %311 = vmatpush1.msra.mxu0 0.0
    %312 = vmatprep.subr.mxu0 0.0
    %313 = vmatpush1.msra.mxu0 0.0
    %314 = vmatprep.subr.mxu0 0.0
    %315 = vmatpush1.msra.mxu0 0.0
    %316 = vmatprep.subr.mxu0 0.0
    %317 = vmatpush1.msra.mxu0 0.0
    %318 = vmatprep.subr.mxu0 0.0
    %319 = vmatpush1.msra.mxu0 0.0
    %320 = vmatprep.subr.mxu0 0.0
    %321 = vmatpush1.msra.mxu0 0.0
    %322 = vmatprep.subr.mxu0 0.0
    %323 = vmatpush1.msra.mxu0 0.0
    %324 = vmatprep.subr.mxu0 0.0
    %325 = vmatpush1.msra.mxu0 0.0
    %326 = vmatprep.subr.mxu0 0.0
    %327 = vmatpush1.msra.mxu0 0.0
    %328 = vmatprep.subr.mxu0 0.0
    %329 = vmatpush1.msra.mxu0 0.0
    %330 = vmatprep.subr.mxu0 0.0
    %331 = vmatpush1.msra.mxu0 0.0
    %332 = vmatprep.subr.mxu0 0.0
    %333 = vmatpush1.msra.mxu0 0.0
    %334 = vmatprep.subr.mxu0 0.0
    %335 = vmatpush1.msra.mxu0 0.0
    %336 = vmatprep.subr.mxu0 0.0
    %337 = vmatpush1.msra.mxu0 0.0
    %338 = vmatprep.subr.mxu0 0.0
    %339 = vmatpush1.msra.mxu0 0.0
    %340 = vmatprep.subr.mxu0 0.0
    %341 = vmatpush1.msra.mxu0 0.0
    %342 = vmatprep.mubr.f32.mxu0 0.0
    %343 = vmatmul.mubr.f32.gmra.mrb[0].mxu0 %v197
    %v344 = vpop.f32.mrb[0].mxu0
    %v345 = vadd.f32 %v189, %v344
    %v346 = vpop.f32.mrb[0].mxu0
    %347 = vdwg.mxu0
    %s348 = scalar_lea.vmem [#allocation11], 8
    %v349 = vld [vmem:[%s348] sm:$0xff]
    %v350 = vadd.f32 %v345, %v349
    %s351 = scalar_lea.vmem [#allocation2], 8
    %v352 = vld [vmem:[%s351] sm:$0xff]
    %v353 = vmul.f32 %v352, %v350
    %s354 = scalar_lea.vmem [#allocation13], 8
    %355 = vst.msk [vmem:[%s354] sm:$0xff] %vm108, %v353
    // Predicated region
    $region50: #{tpu_custom_call.1} parent=1 // pred_check
      _
    $region51: #{tpu_custom_call.1} parent=1 // pred_check_branch
      %357 = sbr.rel (0) target = $region53
    $region52: #{tpu_custom_call.1} parent=1 // pred_region
      %s359 = ssub.s32 256, 256
      %360 = vsyncadd [#allocation4], %s359
      %s361 = sshll.u32 [#allocation13], 4
      %s362 = int_to_ptr.vmem [resolvable:$true] %s361
      %367 = dma.vmem_to_hbm [thread:$0]  %s362, 256, %s6, [#allocation4], 128, 128, 8
    $region53: #{tpu_custom_call.1} parent=1 // pred_fallthru
      _
    // Predicated region
    $region54: #{tpu_custom_call.1} parent=1 // pred_check
      _
    $region55: #{tpu_custom_call.1} parent=1 // pred_check_branch
      %369 = sbr.rel (0) target = $region57
    $region56: #{tpu_custom_call.1} parent=1 // pred_region
      %370 = dma.done [#allocation4], 256
    $region57: #{tpu_custom_call.1} parent=1 // pred_fallthru
      _
    %371 = vsyncpa [#allocation3], 1
    %372 = vsyncpa [#allocation6], 1
    %373 = vsyncpa [#allocation9], 1
    %374 = vsyncpa [#allocation12], 1
    %375 = vsyncpa [#allocation4], 1

</llo_original>
